<compile_context>
chip_gen: v7x
topology: tpu7x:2x2x1
jax: 0.10.0
libtpu: 0.0.40
codegen_flags: <defaults>
</compile_context>

<pallas_src>
import functools

import jax
import jax.numpy as jnp
from jax.experimental import pallas as pl
from jax.experimental.pallas import tpu as pltpu


LANE = 128      # lane width (points per row)
TM_MAX = 512    # max rows per block -> 512*128*4B = 256 KiB per block buffer


def _machine_fwd_kernel(a, h, nn, x_ref, coeffs_ref, o_ref):
    # x_ref:      (TM, LANE) f32 VMEM block of sample points
    # coeffs_ref: (NN,)      f32 SMEM (whole array, resident)
    # o_ref:      (TM, LANE) f32 VMEM output block
    x = x_ref[...]
    inv_h = 1.0 / h
    acc = jnp.zeros_like(x)
    # Unrolled VPU accumulation over the NN hat functions; node_i is a compile-time
    # scalar constant, coeffs_ref[i] is an SMEM scalar broadcast.
    for i in range(nn):
        node_i = a + i * h
        phi = jnp.maximum(0.0, 1.0 - jnp.abs(x - node_i) * inv_h)
        acc = acc + coeffs_ref[i] * phi
    o_ref[...] = acc


def _choose_tm(nb):
    """Pick a block row count: as big as possible, multiple of 8, and (when the input is
    large enough) leaving >= 2 grid steps so the grid can shard across TensorCores."""
    tm = TM_MAX
    while tm > 8 and nb < 2 * tm:
        tm //= 2
    return max(tm, 8)


def machine_forward(x, coeffs, *, a=0.0, b=2.0):
    """Pallas equivalent of Machine.forward(x).

    x:      any shape, flattened row-major to (N,) like torch .reshape(-1, 1)
    coeffs: (NN,) float32
    returns (N,) float32
    """
    nn = int(coeffs.shape[0])
    h = (b - a) / (nn - 1)

    x_flat = x.reshape(-1).astype(jnp.float32)
    n = x_flat.shape[0]

    nb = pl.cdiv(n, LANE)
    tm = _choose_tm(nb)
    grid = pl.cdiv(nb, tm)
    nb_pad = grid * tm
    n_pad = nb_pad * LANE

    padded = n_pad != n
    if padded:
        # pad only when needed; padded lanes are sliced off below
        x_flat = jnp.pad(x_flat, (0, n_pad - n))
    x2d = x_flat.reshape(nb_pad, LANE)

    coeffs_f32 = coeffs.reshape(-1).astype(jnp.float32)

    out2d = pl.pallas_call(
        functools.partial(_machine_fwd_kernel, float(a), float(h), nn),
        out_shape=jax.ShapeDtypeStruct((nb_pad, LANE), jnp.float32),
        grid_spec=pltpu.PrefetchScalarGridSpec(
            num_scalar_prefetch=0,
            grid=(grid,),
            in_specs=[
                pl.BlockSpec((tm, LANE), lambda i: (i, 0)),            # x block (VMEM)
                pl.BlockSpec(memory_space=pltpu.MemorySpace.SMEM),     # coeffs (SMEM)
            ],
            out_specs=pl.BlockSpec((tm, LANE), lambda i: (i, 0)),
        ),
        compiler_params=pltpu.CompilerParams(
            dimension_semantics=("parallel",)),
    )(x2d, coeffs_f32)

    out = out2d.reshape(-1)
    return out[:n] if padded else out


def machine_forward_ref(x, coeffs, *, a=0.0, b=2.0):
    """Pure-JAX reference of the PyTorch forward."""
    nn = coeffs.shape[0]
    h = (b - a) / (nn - 1)
    xf = x.reshape(-1, 1).astype(jnp.float32)                         # (N, 1)
    nodes = (a + h * jnp.arange(nn, dtype=jnp.float32)).reshape(1, nn)
    phis = jnp.maximum(0.0, 1.0 - jnp.abs(xf - nodes) / h)            # (N, NN)
    return phis @ coeffs.astype(jnp.float32)                          # (N,)


# TODO(synk): solve/loss_interpolate/train (torch.linalg.lstsq + Adam optimizer loop) are
# host-side fitting procedures, not part of the forward pass, and are not translated.


if __name__ == "__main__":
    key = jax.random.PRNGKey(0)
    k_x, k_c = jax.random.split(key)

    # small shapes consistent with the module: sample points in [0, 2], NN hat functions
    NN = 16                               # n_neurons
    x = jax.random.uniform(k_x, (2, 128), dtype=jnp.float32, minval=0.0, maxval=2.0)
    # Machine.__init__ sets coeffs = zeros(NN); use deterministic nonzero values so the
    # accumulation is exercised (synthetic init, no checkpoint load).
    coeffs = jax.random.normal(k_c, (NN,), dtype=jnp.float32)

    out = machine_forward(x, coeffs)
    out = jax.block_until_ready(out)

    ref = machine_forward_ref(x, coeffs)
    assert out.shape == (x.size,)
    assert jnp.allclose(out, ref, atol=1e-5, rtol=1e-5), "mismatch vs reference"

    print("KERNEL_OK")
</pallas_src>

<mosaic_0001>
module attributes {stable_mosaic.version = 11 : i64} {
  func.func @_machine_fwd_kernel(%arg0: i32, %arg1: memref<8x128xf32, #tpu.memory_space<vmem>>, %arg2: memref<16xf32, #tpu.memory_space<smem>>, %arg3: memref<8x128xf32, #tpu.memory_space<vmem>>) attributes {dimension_semantics = [#tpu.dimension_semantics<parallel>], iteration_bounds = array<i64: 1>, scalar_prefetch = 0 : i64, scratch_operands = 0 : i64, tpu.core_type = #tpu.core_type<tc>, window_params = [{transform_indices = @transform_0, window_bounds = array<i64: 8, 128>}, {transform_indices = @transform_1, window_bounds = array<i64: 16>}, {transform_indices = @transform_2, window_bounds = array<i64: 8, 128>}]} {
    %c0 = arith.constant 0 : index
    %c0_0 = arith.constant 0 : index
    %0 = vector.load %arg1[%c0, %c0_0] : memref<8x128xf32, #tpu.memory_space<vmem>>, vector<8x128xf32>
    %cst = arith.constant 0.000000e+00 : f32
    %1 = vector.broadcast %cst : f32 to vector<8x128xf32>
    %cst_1 = arith.constant 0.000000e+00 : f32
    %2 = vector.broadcast %cst_1 : f32 to vector<8x128xf32>
    %3 = arith.subf %0, %2 : vector<8x128xf32>
    %4 = math.absf %3 : vector<8x128xf32>
    %cst_2 = arith.constant 7.500000e+00 : f32
    %5 = vector.broadcast %cst_2 : f32 to vector<8x128xf32>
    %6 = arith.mulf %4, %5 : vector<8x128xf32>
    %cst_3 = arith.constant 1.000000e+00 : f32
    %7 = vector.broadcast %cst_3 : f32 to vector<8x128xf32>
    %8 = arith.subf %7, %6 : vector<8x128xf32>
    %cst_4 = arith.constant 0.000000e+00 : f32
    %9 = vector.broadcast %cst_4 : f32 to vector<8x128xf32>
    %10 = arith.maximumf %9, %8 : vector<8x128xf32>
    %c0_5 = arith.constant 0 : index
    %11 = memref.load %arg2[%c0_5] : memref<16xf32, #tpu.memory_space<smem>>
    %12 = vector.broadcast %11 : f32 to vector<8x128xf32>
    %13 = arith.mulf %12, %10 : vector<8x128xf32>
    %14 = arith.addf %1, %13 : vector<8x128xf32>
    %cst_6 = arith.constant 0.13333334 : f32
    %15 = vector.broadcast %cst_6 : f32 to vector<8x128xf32>
    %16 = arith.subf %0, %15 : vector<8x128xf32>
    %17 = math.absf %16 : vector<8x128xf32>
    %cst_7 = arith.constant 7.500000e+00 : f32
    %18 = vector.broadcast %cst_7 : f32 to vector<8x128xf32>
    %19 = arith.mulf %17, %18 : vector<8x128xf32>
    %cst_8 = arith.constant 1.000000e+00 : f32
    %20 = vector.broadcast %cst_8 : f32 to vector<8x128xf32>
    %21 = arith.subf %20, %19 : vector<8x128xf32>
    %cst_9 = arith.constant 0.000000e+00 : f32
    %22 = vector.broadcast %cst_9 : f32 to vector<8x128xf32>
    %23 = arith.maximumf %22, %21 : vector<8x128xf32>
    %c1 = arith.constant 1 : index
    %24 = memref.load %arg2[%c1] : memref<16xf32, #tpu.memory_space<smem>>
    %25 = vector.broadcast %24 : f32 to vector<8x128xf32>
    %26 = arith.mulf %25, %23 : vector<8x128xf32>
    %27 = arith.addf %14, %26 : vector<8x128xf32>
    %cst_10 = arith.constant 0.266666681 : f32
    %28 = vector.broadcast %cst_10 : f32 to vector<8x128xf32>
    %29 = arith.subf %0, %28 : vector<8x128xf32>
    %30 = math.absf %29 : vector<8x128xf32>
    %cst_11 = arith.constant 7.500000e+00 : f32
    %31 = vector.broadcast %cst_11 : f32 to vector<8x128xf32>
    %32 = arith.mulf %30, %31 : vector<8x128xf32>
    %cst_12 = arith.constant 1.000000e+00 : f32
    %33 = vector.broadcast %cst_12 : f32 to vector<8x128xf32>
    %34 = arith.subf %33, %32 : vector<8x128xf32>
    %cst_13 = arith.constant 0.000000e+00 : f32
    %35 = vector.broadcast %cst_13 : f32 to vector<8x128xf32>
    %36 = arith.maximumf %35, %34 : vector<8x128xf32>
    %c2 = arith.constant 2 : index
    %37 = memref.load %arg2[%c2] : memref<16xf32, #tpu.memory_space<smem>>
    %38 = vector.broadcast %37 : f32 to vector<8x128xf32>
    %39 = arith.mulf %38, %36 : vector<8x128xf32>
    %40 = arith.addf %27, %39 : vector<8x128xf32>
    %cst_14 = arith.constant 4.000000e-01 : f32
    %41 = vector.broadcast %cst_14 : f32 to vector<8x128xf32>
    %42 = arith.subf %0, %41 : vector<8x128xf32>
    %43 = math.absf %42 : vector<8x128xf32>
    %cst_15 = arith.constant 7.500000e+00 : f32
    %44 = vector.broadcast %cst_15 : f32 to vector<8x128xf32>
    %45 = arith.mulf %43, %44 : vector<8x128xf32>
    %cst_16 = arith.constant 1.000000e+00 : f32
    %46 = vector.broadcast %cst_16 : f32 to vector<8x128xf32>
    %47 = arith.subf %46, %45 : vector<8x128xf32>
    %cst_17 = arith.constant 0.000000e+00 : f32
    %48 = vector.broadcast %cst_17 : f32 to vector<8x128xf32>
    %49 = arith.maximumf %48, %47 : vector<8x128xf32>
    %c3 = arith.constant 3 : index
    %50 = memref.load %arg2[%c3] : memref<16xf32, #tpu.memory_space<smem>>
    %51 = vector.broadcast %50 : f32 to vector<8x128xf32>
    %52 = arith.mulf %51, %49 : vector<8x128xf32>
    %53 = arith.addf %40, %52 : vector<8x128xf32>
    %cst_18 = arith.constant 0.533333361 : f32
    %54 = vector.broadcast %cst_18 : f32 to vector<8x128xf32>
    %55 = arith.subf %0, %54 : vector<8x128xf32>
    %56 = math.absf %55 : vector<8x128xf32>
    %cst_19 = arith.constant 7.500000e+00 : f32
    %57 = vector.broadcast %cst_19 : f32 to vector<8x128xf32>
    %58 = arith.mulf %56, %57 : vector<8x128xf32>
    %cst_20 = arith.constant 1.000000e+00 : f32
    %59 = vector.broadcast %cst_20 : f32 to vector<8x128xf32>
    %60 = arith.subf %59, %58 : vector<8x128xf32>
    %cst_21 = arith.constant 0.000000e+00 : f32
    %61 = vector.broadcast %cst_21 : f32 to vector<8x128xf32>
    %62 = arith.maximumf %61, %60 : vector<8x128xf32>
    %c4 = arith.constant 4 : index
    %63 = memref.load %arg2[%c4] : memref<16xf32, #tpu.memory_space<smem>>
    %64 = vector.broadcast %63 : f32 to vector<8x128xf32>
    %65 = arith.mulf %64, %62 : vector<8x128xf32>
    %66 = arith.addf %53, %65 : vector<8x128xf32>
    %cst_22 = arith.constant 0.666666686 : f32
    %67 = vector.broadcast %cst_22 : f32 to vector<8x128xf32>
    %68 = arith.subf %0, %67 : vector<8x128xf32>
    %69 = math.absf %68 : vector<8x128xf32>
    %cst_23 = arith.constant 7.500000e+00 : f32
    %70 = vector.broadcast %cst_23 : f32 to vector<8x128xf32>
    %71 = arith.mulf %69, %70 : vector<8x128xf32>
    %cst_24 = arith.constant 1.000000e+00 : f32
    %72 = vector.broadcast %cst_24 : f32 to vector<8x128xf32>
    %73 = arith.subf %72, %71 : vector<8x128xf32>
    %cst_25 = arith.constant 0.000000e+00 : f32
    %74 = vector.broadcast %cst_25 : f32 to vector<8x128xf32>
    %75 = arith.maximumf %74, %73 : vector<8x128xf32>
    %c5 = arith.constant 5 : index
    %76 = memref.load %arg2[%c5] : memref<16xf32, #tpu.memory_space<smem>>
    %77 = vector.broadcast %76 : f32 to vector<8x128xf32>
    %78 = arith.mulf %77, %75 : vector<8x128xf32>
    %79 = arith.addf %66, %78 : vector<8x128xf32>
    %cst_26 = arith.constant 8.000000e-01 : f32
    %80 = vector.broadcast %cst_26 : f32 to vector<8x128xf32>
    %81 = arith.subf %0, %80 : vector<8x128xf32>
    %82 = math.absf %81 : vector<8x128xf32>
    %cst_27 = arith.constant 7.500000e+00 : f32
    %83 = vector.broadcast %cst_27 : f32 to vector<8x128xf32>
    %84 = arith.mulf %82, %83 : vector<8x128xf32>
    %cst_28 = arith.constant 1.000000e+00 : f32
    %85 = vector.broadcast %cst_28 : f32 to vector<8x128xf32>
    %86 = arith.subf %85, %84 : vector<8x128xf32>
    %cst_29 = arith.constant 0.000000e+00 : f32
    %87 = vector.broadcast %cst_29 : f32 to vector<8x128xf32>
    %88 = arith.maximumf %87, %86 : vector<8x128xf32>
    %c6 = arith.constant 6 : index
    %89 = memref.load %arg2[%c6] : memref<16xf32, #tpu.memory_space<smem>>
    %90 = vector.broadcast %89 : f32 to vector<8x128xf32>
    %91 = arith.mulf %90, %88 : vector<8x128xf32>
    %92 = arith.addf %79, %91 : vector<8x128xf32>
    %cst_30 = arith.constant 0.933333337 : f32
    %93 = vector.broadcast %cst_30 : f32 to vector<8x128xf32>
    %94 = arith.subf %0, %93 : vector<8x128xf32>
    %95 = math.absf %94 : vector<8x128xf32>
    %cst_31 = arith.constant 7.500000e+00 : f32
    %96 = vector.broadcast %cst_31 : f32 to vector<8x128xf32>
    %97 = arith.mulf %95, %96 : vector<8x128xf32>
    %cst_32 = arith.constant 1.000000e+00 : f32
    %98 = vector.broadcast %cst_32 : f32 to vector<8x128xf32>
    %99 = arith.subf %98, %97 : vector<8x128xf32>
    %cst_33 = arith.constant 0.000000e+00 : f32
    %100 = vector.broadcast %cst_33 : f32 to vector<8x128xf32>
    %101 = arith.maximumf %100, %99 : vector<8x128xf32>
    %c7 = arith.constant 7 : index
    %102 = memref.load %arg2[%c7] : memref<16xf32, #tpu.memory_space<smem>>
    %103 = vector.broadcast %102 : f32 to vector<8x128xf32>
    %104 = arith.mulf %103, %101 : vector<8x128xf32>
    %105 = arith.addf %92, %104 : vector<8x128xf32>
    %cst_34 = arith.constant 1.06666672 : f32
    %106 = vector.broadcast %cst_34 : f32 to vector<8x128xf32>
    %107 = arith.subf %0, %106 : vector<8x128xf32>
    %108 = math.absf %107 : vector<8x128xf32>
    %cst_35 = arith.constant 7.500000e+00 : f32
    %109 = vector.broadcast %cst_35 : f32 to vector<8x128xf32>
    %110 = arith.mulf %108, %109 : vector<8x128xf32>
    %cst_36 = arith.constant 1.000000e+00 : f32
    %111 = vector.broadcast %cst_36 : f32 to vector<8x128xf32>
    %112 = arith.subf %111, %110 : vector<8x128xf32>
    %cst_37 = arith.constant 0.000000e+00 : f32
    %113 = vector.broadcast %cst_37 : f32 to vector<8x128xf32>
    %114 = arith.maximumf %113, %112 : vector<8x128xf32>
    %c8 = arith.constant 8 : index
    %115 = memref.load %arg2[%c8] : memref<16xf32, #tpu.memory_space<smem>>
    %116 = vector.broadcast %115 : f32 to vector<8x128xf32>
    %117 = arith.mulf %116, %114 : vector<8x128xf32>
    %118 = arith.addf %105, %117 : vector<8x128xf32>
    %cst_38 = arith.constant 1.200000e+00 : f32
    %119 = vector.broadcast %cst_38 : f32 to vector<8x128xf32>
    %120 = arith.subf %0, %119 : vector<8x128xf32>
    %121 = math.absf %120 : vector<8x128xf32>
    %cst_39 = arith.constant 7.500000e+00 : f32
    %122 = vector.broadcast %cst_39 : f32 to vector<8x128xf32>
    %123 = arith.mulf %121, %122 : vector<8x128xf32>
    %cst_40 = arith.constant 1.000000e+00 : f32
    %124 = vector.broadcast %cst_40 : f32 to vector<8x128xf32>
    %125 = arith.subf %124, %123 : vector<8x128xf32>
    %cst_41 = arith.constant 0.000000e+00 : f32
    %126 = vector.broadcast %cst_41 : f32 to vector<8x128xf32>
    %127 = arith.maximumf %126, %125 : vector<8x128xf32>
    %c9 = arith.constant 9 : index
    %128 = memref.load %arg2[%c9] : memref<16xf32, #tpu.memory_space<smem>>
    %129 = vector.broadcast %128 : f32 to vector<8x128xf32>
    %130 = arith.mulf %129, %127 : vector<8x128xf32>
    %131 = arith.addf %118, %130 : vector<8x128xf32>
    %cst_42 = arith.constant 1.33333337 : f32
    %132 = vector.broadcast %cst_42 : f32 to vector<8x128xf32>
    %133 = arith.subf %0, %132 : vector<8x128xf32>
    %134 = math.absf %133 : vector<8x128xf32>
    %cst_43 = arith.constant 7.500000e+00 : f32
    %135 = vector.broadcast %cst_43 : f32 to vector<8x128xf32>
    %136 = arith.mulf %134, %135 : vector<8x128xf32>
    %cst_44 = arith.constant 1.000000e+00 : f32
    %137 = vector.broadcast %cst_44 : f32 to vector<8x128xf32>
    %138 = arith.subf %137, %136 : vector<8x128xf32>
    %cst_45 = arith.constant 0.000000e+00 : f32
    %139 = vector.broadcast %cst_45 : f32 to vector<8x128xf32>
    %140 = arith.maximumf %139, %138 : vector<8x128xf32>
    %c10 = arith.constant 10 : index
    %141 = memref.load %arg2[%c10] : memref<16xf32, #tpu.memory_space<smem>>
    %142 = vector.broadcast %141 : f32 to vector<8x128xf32>
    %143 = arith.mulf %142, %140 : vector<8x128xf32>
    %144 = arith.addf %131, %143 : vector<8x128xf32>
    %cst_46 = arith.constant 1.4666667 : f32
    %145 = vector.broadcast %cst_46 : f32 to vector<8x128xf32>
    %146 = arith.subf %0, %145 : vector<8x128xf32>
    %147 = math.absf %146 : vector<8x128xf32>
    %cst_47 = arith.constant 7.500000e+00 : f32
    %148 = vector.broadcast %cst_47 : f32 to vector<8x128xf32>
    %149 = arith.mulf %147, %148 : vector<8x128xf32>
    %cst_48 = arith.constant 1.000000e+00 : f32
    %150 = vector.broadcast %cst_48 : f32 to vector<8x128xf32>
    %151 = arith.subf %150, %149 : vector<8x128xf32>
    %cst_49 = arith.constant 0.000000e+00 : f32
    %152 = vector.broadcast %cst_49 : f32 to vector<8x128xf32>
    %153 = arith.maximumf %152, %151 : vector<8x128xf32>
    %c11 = arith.constant 11 : index
    %154 = memref.load %arg2[%c11] : memref<16xf32, #tpu.memory_space<smem>>
    %155 = vector.broadcast %154 : f32 to vector<8x128xf32>
    %156 = arith.mulf %155, %153 : vector<8x128xf32>
    %157 = arith.addf %144, %156 : vector<8x128xf32>
    %cst_50 = arith.constant 1.600000e+00 : f32
    %158 = vector.broadcast %cst_50 : f32 to vector<8x128xf32>
    %159 = arith.subf %0, %158 : vector<8x128xf32>
    %160 = math.absf %159 : vector<8x128xf32>
    %cst_51 = arith.constant 7.500000e+00 : f32
    %161 = vector.broadcast %cst_51 : f32 to vector<8x128xf32>
    %162 = arith.mulf %160, %161 : vector<8x128xf32>
    %cst_52 = arith.constant 1.000000e+00 : f32
    %163 = vector.broadcast %cst_52 : f32 to vector<8x128xf32>
    %164 = arith.subf %163, %162 : vector<8x128xf32>
    %cst_53 = arith.constant 0.000000e+00 : f32
    %165 = vector.broadcast %cst_53 : f32 to vector<8x128xf32>
    %166 = arith.maximumf %165, %164 : vector<8x128xf32>
    %c12 = arith.constant 12 : index
    %167 = memref.load %arg2[%c12] : memref<16xf32, #tpu.memory_space<smem>>
    %168 = vector.broadcast %167 : f32 to vector<8x128xf32>
    %169 = arith.mulf %168, %166 : vector<8x128xf32>
    %170 = arith.addf %157, %169 : vector<8x128xf32>
    %cst_54 = arith.constant 1.73333335 : f32
    %171 = vector.broadcast %cst_54 : f32 to vector<8x128xf32>
    %172 = arith.subf %0, %171 : vector<8x128xf32>
    %173 = math.absf %172 : vector<8x128xf32>
    %cst_55 = arith.constant 7.500000e+00 : f32
    %174 = vector.broadcast %cst_55 : f32 to vector<8x128xf32>
    %175 = arith.mulf %173, %174 : vector<8x128xf32>
    %cst_56 = arith.constant 1.000000e+00 : f32
    %176 = vector.broadcast %cst_56 : f32 to vector<8x128xf32>
    %177 = arith.subf %176, %175 : vector<8x128xf32>
    %cst_57 = arith.constant 0.000000e+00 : f32
    %178 = vector.broadcast %cst_57 : f32 to vector<8x128xf32>
    %179 = arith.maximumf %178, %177 : vector<8x128xf32>
    %c13 = arith.constant 13 : index
    %180 = memref.load %arg2[%c13] : memref<16xf32, #tpu.memory_space<smem>>
    %181 = vector.broadcast %180 : f32 to vector<8x128xf32>
    %182 = arith.mulf %181, %179 : vector<8x128xf32>
    %183 = arith.addf %170, %182 : vector<8x128xf32>
    %cst_58 = arith.constant 1.86666667 : f32
    %184 = vector.broadcast %cst_58 : f32 to vector<8x128xf32>
    %185 = arith.subf %0, %184 : vector<8x128xf32>
    %186 = math.absf %185 : vector<8x128xf32>
    %cst_59 = arith.constant 7.500000e+00 : f32
    %187 = vector.broadcast %cst_59 : f32 to vector<8x128xf32>
    %188 = arith.mulf %186, %187 : vector<8x128xf32>
    %cst_60 = arith.constant 1.000000e+00 : f32
    %189 = vector.broadcast %cst_60 : f32 to vector<8x128xf32>
    %190 = arith.subf %189, %188 : vector<8x128xf32>
    %cst_61 = arith.constant 0.000000e+00 : f32
    %191 = vector.broadcast %cst_61 : f32 to vector<8x128xf32>
    %192 = arith.maximumf %191, %190 : vector<8x128xf32>
    %c14 = arith.constant 14 : index
    %193 = memref.load %arg2[%c14] : memref<16xf32, #tpu.memory_space<smem>>
    %194 = vector.broadcast %193 : f32 to vector<8x128xf32>
    %195 = arith.mulf %194, %192 : vector<8x128xf32>
    %196 = arith.addf %183, %195 : vector<8x128xf32>
    %cst_62 = arith.constant 2.000000e+00 : f32
    %197 = vector.broadcast %cst_62 : f32 to vector<8x128xf32>
    %198 = arith.subf %0, %197 : vector<8x128xf32>
    %199 = math.absf %198 : vector<8x128xf32>
    %cst_63 = arith.constant 7.500000e+00 : f32
    %200 = vector.broadcast %cst_63 : f32 to vector<8x128xf32>
    %201 = arith.mulf %199, %200 : vector<8x128xf32>
    %cst_64 = arith.constant 1.000000e+00 : f32
    %202 = vector.broadcast %cst_64 : f32 to vector<8x128xf32>
    %203 = arith.subf %202, %201 : vector<8x128xf32>
    %cst_65 = arith.constant 0.000000e+00 : f32
    %204 = vector.broadcast %cst_65 : f32 to vector<8x128xf32>
    %205 = arith.maximumf %204, %203 : vector<8x128xf32>
    %c15 = arith.constant 15 : index
    %206 = memref.load %arg2[%c15] : memref<16xf32, #tpu.memory_space<smem>>
    %207 = vector.broadcast %206 : f32 to vector<8x128xf32>
    %208 = arith.mulf %207, %205 : vector<8x128xf32>
    %209 = arith.addf %196, %208 : vector<8x128xf32>
    %c0_66 = arith.constant 0 : index
    %c0_67 = arith.constant 0 : index
    %210 = vector.load %arg3[%c0_66, %c0_67] : memref<8x128xf32, #tpu.memory_space<vmem>>, vector<8x128xf32>
    tpu.vector_store %arg3[%c0_66, %c0_67], %209 {strides = array<i32>} : memref<8x128xf32, #tpu.memory_space<vmem>>, vector<8x128xf32>,
    return
  }
  func.func @transform_0(%arg0: i32) -> (i32, i32) {
    %c0_i32 = arith.constant 0 : i32
    %c0_i32_0 = arith.constant 0 : i32
    return %arg0, %c0_i32 : i32, i32
  }
  func.func @transform_1(%arg0: i32) -> i32 {
    %c0_i32 = arith.constant 0 : i32
    %c0_i32_0 = arith.constant 0 : i32
    return %c0_i32 : i32
  }
  func.func @transform_2(%arg0: i32) -> (i32, i32) {
    %c0_i32 = arith.constant 0 : i32
    %c0_i32_0 = arith.constant 0 : i32
    return %arg0, %c0_i32 : i32, i32
  }
}

</mosaic_0001>

<llo_original>
// kernel: tpu_custom_call.1
$region0: #{tpu_custom_call.1}
  #allocation0 [shape = 'u32[]', space=smem, size = 0x4, offset = 0x4, fixed_abs, tag = 'smem constant byte address 0x4 - core index']
  #allocation1 [shape = 'u32[144,128]{1,0:T(1,128)}', space=vmem, size = 0x12000, scoped, tag = 'internal scratch']
  %s0 = inlined_call_operand.hbm [shape: f32[8,128], index: 0, kind: input, shape index: {}]
  %s1 = inlined_call_operand.vmem [shape: f32[16], index: 1, kind: input, shape index: {}]
  %s2 = inlined_call_operand.hbm [shape: f32[8,128], index: 2, kind: output, shape index: {}]
  %s3 = sld [smem:[#allocation0]]
  $region26: #{tpu_custom_call.1} parent=0
    _
  %s5 = ssub.s32 1, %s3
  %s6 = scalar_select 0, %s5, %s3
  $region1: #{tpu_custom_call.1} parent=0
    #allocation2 [shape = 'u8[4096]{0}', space=vmem, size = 0x1000, scoped, tag = 'input window, operand 0, single buffered']
    #allocation3 [shape = 's32[1]{0}', space=sflag, size = 0x4, scoped, tag = 'scoped memory for tpu_custom_call.1']
    #allocation4 [shape = 's32[1]{0}', space=sflag, size = 0x4, scoped, tag = 'scoped memory for tpu_custom_call.1']
    #allocation5 [shape = 's32[1]{0}', space=sflag, size = 0x4, scoped, tag = 'scoped memory for tpu_custom_call.1']
    #allocation6 [shape = 'u8[512]{0}', space=smem, size = 0x200, scoped, tag = 'input window, operand 1, single buffered']
    #allocation7 [shape = 'u8[4096]{0}', space=vmem, size = 0x1000, scoped, tag = 'output window, operand 0, single buffered']
    %7 = vsyncpa [#allocation3], 0
    %8 = vsyncpa [#allocation5], 0
    %9 = vsyncpa [#allocation4], 0
    // Predicated region
    $region2: #{tpu_custom_call.1} parent=1 // pred_check
      _
    $region3: #{tpu_custom_call.1} parent=1 // pred_check_branch
      %11 = sbr.rel (0) target = $region5
    $region4: #{tpu_custom_call.1} parent=1 // pred_region
      %s13 = ssub.s32 128, 128
      %14 = vsyncadd [#allocation3], %s13
      %s16 = sshll.u32 [#allocation2], 4
      %s17 = int_to_ptr.vmem [resolvable:$true] %s16
      %19 = dma.hbm_to_vmem [thread:$0]  %s0, 128, %s17, [#allocation3]
    $region5: #{tpu_custom_call.1} parent=1 // pred_fallthru
      _
    // Predicated region
    $region6: #{tpu_custom_call.1} parent=1 // pred_check
      _
    $region7: #{tpu_custom_call.1} parent=1 // pred_check_branch
      %21 = sbr.rel (0) target = $region9
    $region8: #{tpu_custom_call.1} parent=1 // pred_region
      %s23 = ssub.s32 16, 16
      %24 = vsyncadd [#allocation5], %s23
      %s26 = sshll.u32 %s1, 4
      %s27 = int_to_ptr.vmem [resolvable:$true] %s26
      %29 = dma.vmem_to_smem %s27, 16, [#allocation6], [#allocation5]
    $region9: #{tpu_custom_call.1} parent=1 // pred_fallthru
      _
    // Predicated region
    $region10: #{tpu_custom_call.1} parent=1 // pred_check
      _
    $region11: #{tpu_custom_call.1} parent=1 // pred_check_branch
      %31 = sbr.rel (0) target = $region13
    $region12: #{tpu_custom_call.1} parent=1 // pred_region
      %32 = dma.done [#allocation3], 128
    $region13: #{tpu_custom_call.1} parent=1 // pred_fallthru
      _
    // Predicated region
    $region14: #{tpu_custom_call.1} parent=1 // pred_check
      _
    $region15: #{tpu_custom_call.1} parent=1 // pred_check_branch
      %34 = sbr.rel (0) target = $region17
    $region16: #{tpu_custom_call.1} parent=1 // pred_region
      %35 = dma.done [#allocation5], 16
    $region17: #{tpu_custom_call.1} parent=1 // pred_fallthru
      _
    %36 = sfence
    %v37 = vld [vmem:[#allocation2] sm:$0xff]
    %v38 = vand.u32 2147483647, %v37
    %v39 = vmul.f32 %v38, 7.5
    %v40 = vsub.f32 1.0, %v39
    %v41 = vmax.f32 %v40, 0.0
    %s42 = sld [smem:[#allocation6]]
    %v43 = vstv %s42
    %v44 = vmul.f32 %v43, %v41
    %v45 = vadd.f32 %v44, 0.0
    %v46 = vsub.f32 %v37, 0.13333334
    %v47 = vand.u32 2147483647, %v46
    %v48 = vmul.f32 %v47, 7.5
    %v49 = vsub.f32 1.0, %v48
    %v50 = vmax.f32 %v49, 0.0
    %s51 = sld [smem:[#allocation6 + $0x1]]
    %v52 = vstv %s51
    %v53 = vmul.f32 %v52, %v50
    %v54 = vadd.f32 %v45, %v53
    %v55 = vsub.f32 %v37, 0.26666668
    %v56 = vand.u32 2147483647, %v55
    %v57 = vmul.f32 %v56, 7.5
    %v58 = vsub.f32 1.0, %v57
    %v59 = vmax.f32 %v58, 0.0
    %s60 = sld [smem:[#allocation6 + $0x2]]
    %v61 = vstv %s60
    %v62 = vmul.f32 %v61, %v59
    %v63 = vadd.f32 %v54, %v62
    %v64 = vsub.f32 %v37, 0.4
    %v65 = vand.u32 2147483647, %v64
    %v66 = vmul.f32 %v65, 7.5
    %v67 = vsub.f32 1.0, %v66
    %v68 = vmax.f32 %v67, 0.0
    %s69 = sld [smem:[#allocation6 + $0x3]]
    %v70 = vstv %s69
    %v71 = vmul.f32 %v70, %v68
    %v72 = vadd.f32 %v63, %v71
    %v73 = vsub.f32 %v37, 0.53333336
    %v74 = vand.u32 2147483647, %v73
    %v75 = vmul.f32 %v74, 7.5
    %v76 = vsub.f32 1.0, %v75
    %v77 = vmax.f32 %v76, 0.0
    %s78 = sld [smem:[#allocation6 + $0x4]]
    %v79 = vstv %s78
    %v80 = vmul.f32 %v79, %v77
    %v81 = vadd.f32 %v72, %v80
    %v82 = vsub.f32 %v37, 0.6666667
    %v83 = vand.u32 2147483647, %v82
    %v84 = vmul.f32 %v83, 7.5
    %v85 = vsub.f32 1.0, %v84
    %v86 = vmax.f32 %v85, 0.0
    %s87 = sld [smem:[#allocation6 + $0x5]]
    %v88 = vstv %s87
    %v89 = vmul.f32 %v88, %v86
    %v90 = vadd.f32 %v81, %v89
    %v91 = vsub.f32 %v37, 0.8
    %v92 = vand.u32 2147483647, %v91
    %v93 = vmul.f32 %v92, 7.5
    %v94 = vsub.f32 1.0, %v93
    %v95 = vmax.f32 %v94, 0.0
    %s96 = sld [smem:[#allocation6 + $0x6]]
    %v97 = vstv %s96
    %v98 = vmul.f32 %v97, %v95
    %v99 = vadd.f32 %v90, %v98
    %v100 = vsub.f32 %v37, 0.93333334
    %v101 = vand.u32 2147483647, %v100
    %v102 = vmul.f32 %v101, 7.5
    %v103 = vsub.f32 1.0, %v102
    %v104 = vmax.f32 %v103, 0.0
    %s105 = sld [smem:[#allocation6 + $0x7]]
    %v106 = vstv %s105
    %v107 = vmul.f32 %v106, %v104
    %v108 = vadd.f32 %v99, %v107
    %v109 = vsub.f32 %v37, 1.0666667
    %v110 = vand.u32 2147483647, %v109
    %v111 = vmul.f32 %v110, 7.5
    %v112 = vsub.f32 1.0, %v111
    %v113 = vmax.f32 %v112, 0.0
    %s114 = sld [smem:[#allocation6 + $0x8]]
    %v115 = vstv %s114
    %v116 = vmul.f32 %v115, %v113
    %v117 = vadd.f32 %v108, %v116
    %v118 = vsub.f32 %v37, 1.2
    %v119 = vand.u32 2147483647, %v118
    %v120 = vmul.f32 %v119, 7.5
    %v121 = vsub.f32 1.0, %v120
    %v122 = vmax.f32 %v121, 0.0
    %s123 = sld [smem:[#allocation6 + $0x9]]
    %v124 = vstv %s123
    %v125 = vmul.f32 %v124, %v122
    %v126 = vadd.f32 %v117, %v125
    %v127 = vsub.f32 %v37, 1.3333334
    %v128 = vand.u32 2147483647, %v127
    %v129 = vmul.f32 %v128, 7.5
    %v130 = vsub.f32 1.0, %v129
    %v131 = vmax.f32 %v130, 0.0
    %s132 = sld [smem:[#allocation6 + $0xa]]
    %v133 = vstv %s132
    %v134 = vmul.f32 %v133, %v131
    %v135 = vadd.f32 %v126, %v134
    %v136 = vsub.f32 %v37, 1.4666667
    %v137 = vand.u32 2147483647, %v136
    %v138 = vmul.f32 %v137, 7.5
    %v139 = vsub.f32 1.0, %v138
    %v140 = vmax.f32 %v139, 0.0
    %s141 = sld [smem:[#allocation6 + $0xb]]
    %v142 = vstv %s141
    %v143 = vmul.f32 %v142, %v140
    %v144 = vadd.f32 %v135, %v143
    %v145 = vsub.f32 %v37, 1.6
    %v146 = vand.u32 2147483647, %v145
    %v147 = vmul.f32 %v146, 7.5
    %v148 = vsub.f32 1.0, %v147
    %v149 = vmax.f32 %v148, 0.0
    %s150 = sld [smem:[#allocation6 + $0xc]]
    %v151 = vstv %s150
    %v152 = vmul.f32 %v151, %v149
    %v153 = vadd.f32 %v144, %v152
    %v154 = vsub.f32 %v37, 1.7333333
    %v155 = vand.u32 2147483647, %v154
    %v156 = vmul.f32 %v155, 7.5
    %v157 = vsub.f32 1.0, %v156
    %v158 = vmax.f32 %v157, 0.0
    %s159 = sld [smem:[#allocation6 + $0xd]]
    %v160 = vstv %s159
    %v161 = vmul.f32 %v160, %v158
    %v162 = vadd.f32 %v153, %v161
    %v163 = vsub.f32 %v37, 1.8666667
    %v164 = vand.u32 2147483647, %v163
    %v165 = vmul.f32 %v164, 7.5
    %v166 = vsub.f32 1.0, %v165
    %v167 = vmax.f32 %v166, 0.0
    %s168 = sld [smem:[#allocation6 + $0xe]]
    %v169 = vstv %s168
    %v170 = vmul.f32 %v169, %v167
    %v171 = vadd.f32 %v162, %v170
    %v172 = vsub.f32 %v37, 2.0
    %v173 = vand.u32 2147483647, %v172
    %v174 = vmul.f32 %v173, 7.5
    %v175 = vsub.f32 1.0, %v174
    %v176 = vmax.f32 %v175, 0.0
    %s177 = sld [smem:[#allocation6 + $0xf]]
    %v178 = vstv %s177
    %v179 = vmul.f32 %v178, %v176
    %v180 = vadd.f32 %v171, %v179
    %181 = vst [vmem:[#allocation7] sm:$0xff] %v180
    // Predicated region
    $region18: #{tpu_custom_call.1} parent=1 // pred_check
      _
    $region19: #{tpu_custom_call.1} parent=1 // pred_check_branch
      %183 = sbr.rel (0) target = $region21
    $region20: #{tpu_custom_call.1} parent=1 // pred_region
      %s185 = ssub.s32 128, 128
      %186 = vsyncadd [#allocation4], %s185
      %s188 = sshll.u32 [#allocation7], 4
      %s189 = int_to_ptr.vmem [resolvable:$true] %s188
      %191 = dma.vmem_to_hbm [thread:$0]  %s189, 128, %s2, [#allocation4]
    $region21: #{tpu_custom_call.1} parent=1 // pred_fallthru
      _
    // Predicated region
    $region22: #{tpu_custom_call.1} parent=1 // pred_check
      _
    $region23: #{tpu_custom_call.1} parent=1 // pred_check_branch
      %193 = sbr.rel (0) target = $region25
    $region24: #{tpu_custom_call.1} parent=1 // pred_region
      %194 = dma.done [#allocation4], 128
    $region25: #{tpu_custom_call.1} parent=1 // pred_fallthru
      _
    %195 = vsyncpa [#allocation3], 1
    %196 = vsyncpa [#allocation4], 1
    %197 = vsyncpa [#allocation5], 1

</llo_original>
